<compile_context>
chip_gen: v7x
topology: tpu7x:2x2x1
jax: 0.10.0
libtpu: 0.0.40
codegen_flags: <defaults>
</compile_context>

<pallas_src>
import jax
import jax.numpy as jnp
from jax.experimental import pallas as pl
from jax.experimental.pallas import tpu as pltpu


def _round_up(x, m):
    return ((x + m - 1) // m) * m


def _cdiv(a, b):
    return -(-a // b)


# -----------------------------------------------------------------------------
# Generation-aware capacity planning.
#   v5e / v6e: 128 MiB VMEM, 1 TensorCore  -> big fused threshold, big tiles.
#   v7x      :  64 MiB VMEM per TC, 2 TCs  -> smaller fused threshold so medium
#              graphs take the tiled path whose parallel row axis uses both TCs.
# -----------------------------------------------------------------------------
_HW_CACHE = {}


def _vmem_capacity_bytes():
    if "vmem" not in _HW_CACHE:
        try:
            _HW_CACHE["vmem"] = int(pltpu.get_tpu_info().vmem_capacity_bytes)
        except Exception:
            _HW_CACHE["vmem"] = 64 * 1024 * 1024   # conservative (v7x per-TC)
    return _HW_CACHE["vmem"]


def _capacity_plan():
    vmem = _vmem_capacity_bytes()
    if vmem >= 96 * 1024 * 1024:
        return {"vmem": vmem, "fuse_max_nodes": 3072, "tile_cap": 2048,
                "dual_core": False}
    return {"vmem": vmem, "fuse_max_nodes": 1024, "tile_cap": 2048,
            "dual_core": True}


def _pick_tile(n, requested, cap, dual_core):
    """Row/col tile (multiple of 128).  On dual-core parts prefer an even
    row-tile count so the 'parallel' axis shards evenly across TensorCores."""
    n128 = _round_up(max(n, 1), 128)
    t = _round_up(max(128, min(requested, cap, n128)), 128)
    if dual_core:
        r = _cdiv(n128, t)
        if n128 > 128 and r % 2 == 1:
            t2 = _round_up(_cdiv(n128, r + 1), 128)
            t = max(t2, 128)
    return t


def _tiled_vmem_limit(tile, f_in, f_out, vmem_cap):
    need = (3 * tile * tile * 2              # A: bf16, Buffered(3)
            + 2 * tile * f_in * 4            # x_src: f32 double buffer
            + 2 * tile * f_out * 4           # out: f32 double buffer
            + tile * f_in * 4                # f32 accumulator scratch
            + 2 * f_in * f_out * 2           # W (bf16)
            + 2 * f_out * 4                  # b
            + (4 << 20))                     # headroom / compiler scratch
    return int(min(max(need, 32 << 20), vmem_cap - (8 << 20)))


def _fused_vmem_limit(n_pad, f_in, f_hid, f_out, vmem_cap):
    fmax = max(f_in, f_hid, f_out)
    need = (2 * n_pad * n_pad * 2            # A (bf16), allow double buffer
            + 8 * n_pad * fmax * 4           # x / h1 / y1 / h2 / out + temps
            + 4 * fmax * fmax * 2            # W1, W2 (bf16)
            + (8 << 20))
    return int(min(max(need, 32 << 20), vmem_cap - (8 << 20)))


# -----------------------------------------------------------------------------
# Tiled per-layer kernel:  out = relu(((1 + eps) * x + A @ x) @ W + b)
# grid = (dst-row tiles i [parallel], src tiles k [arbitrary / reduction])
# -----------------------------------------------------------------------------
def _gin_layer_tiled_kernel(eps_ref, a_ref, x_ref, w_ref, b_ref, out_ref,
                            acc_ref):
    i = pl.program_id(0)            # dst-row tile (parallel)
    k = pl.program_id(1)            # src tile (reduction)

    @pl.when(k == 0)
    def _():
        acc_ref[...] = jnp.zeros_like(acc_ref)

    x_src = x_ref[...]              # f32 [tile, f_in]

    # Neighbor sum-aggregation: bf16 x bf16 on the full-rate MXU path with a
    # f32 accumulator (A is bf16; integer edge counts <= 256 are exact).
    acc_ref[...] += jnp.dot(a_ref[...], x_src.astype(jnp.bfloat16),
                            preferred_element_type=jnp.float32)

    # (1 + eps) * x self term: the diagonal tile's x_src IS x[i], so fold it
    # in here (kept in f32) -- no separate x_self input stream needed.
    @pl.when(k == i)
    def _():
        acc_ref[...] += (1.0 + eps_ref[0]) * x_src

    @pl.when(k == pl.num_programs(1) - 1)
    def _():
        h = acc_ref[...]
        y = jnp.dot(h.astype(jnp.bfloat16), w_ref[...],
                    preferred_element_type=jnp.float32) + b_ref[...]
        out_ref[...] = jnp.maximum(y, 0.0)


def gin_conv_pallas(x, adj, w, b, eps, *, tile=1024, vmem_cap=None):
    """One GINConv layer on padded inputs.

    x:   [Np, Fi]  f32   (Np multiple of `tile`, Fi multiple of 128)
    adj: [Np, Np]  bf16  adj[dst, src] = edge count
    w:   [Fi, Fo]  bf16  (Fo multiple of 128)
    b:   [1,  Fo]  f32
    """
    n_pad, f_in = x.shape
    f_out = w.shape[1]
    assert n_pad % tile == 0 and f_in % 128 == 0 and f_out % 128 == 0
    r = n_pad // tile
    if vmem_cap is None:
        vmem_cap = _vmem_capacity_bytes()
    eps_arr = jnp.full((1,), eps, dtype=jnp.float32)

    cost = pl.CostEstimate(
        flops=2 * n_pad * n_pad * f_in + 2 * n_pad * f_in * f_out,
        transcendentals=0,
        bytes_accessed=(adj.size * adj.dtype.itemsize
                        + r * x.size * x.dtype.itemsize     # x streamed once per row tile
                        + w.size * w.dtype.itemsize + b.size * 4
                        + n_pad * f_out * 4),
    )

    return pl.pallas_call(
        _gin_layer_tiled_kernel,
        out_shape=jax.ShapeDtypeStruct((n_pad, f_out), jnp.float32),
        grid_spec=pltpu.PrefetchScalarGridSpec(
            num_scalar_prefetch=0,
            grid=(r, r),
            in_specs=[
                pl.BlockSpec(memory_space=pltpu.SMEM),                   # eps
                pl.BlockSpec((tile, tile), lambda i, k: (i, k),
                             pipeline_mode=pl.Buffered(3)),              # A[i, k]
                pl.BlockSpec((tile, f_in), lambda i, k: (k, 0)),         # x[k] (src)
                pl.BlockSpec((f_in, f_out), lambda i, k: (0, 0)),        # W (bf16)
                pl.BlockSpec((1, f_out), lambda i, k: (0, 0)),           # b
            ],
            out_specs=pl.BlockSpec((tile, f_out), lambda i, k: (i, 0)),
            scratch_shapes=[pltpu.VMEM((tile, f_in), jnp.float32)],      # agg acc
        ),
        compiler_params=pltpu.CompilerParams(
            dimension_semantics=("parallel", "arbitrary"),
            vmem_limit_bytes=_tiled_vmem_limit(tile, f_in, f_out, vmem_cap),
        ),
        cost_estimate=cost,
    )(eps_arr, adj, x, w, b)


# -----------------------------------------------------------------------------
# Fused small-N kernel: both GIN layers in one launch, A resident in VMEM once.
# -----------------------------------------------------------------------------
def _gin2_fused_kernel(eps_ref, a_ref, x_ref, w1_ref, b1_ref, w2_ref, b2_ref,
                       out_ref):
    a = a_ref[...]                                           # bf16
    x = x_ref[...]                                           # f32
    # Layer 1: bf16 x bf16 MXU, f32 accumulate; self/bias/ReLU kept in f32.
    agg1 = jnp.dot(a, x.astype(jnp.bfloat16), preferred_element_type=jnp.float32)
    h1 = (1.0 + eps_ref[0]) * x + agg1
    y1 = jnp.maximum(
        jnp.dot(h1.astype(jnp.bfloat16), w1_ref[...],
                preferred_element_type=jnp.float32) + b1_ref[...], 0.0)
    # Layer 2 (reuses resident A; h1/y1 never round-trip to HBM).
    agg2 = jnp.dot(a, y1.astype(jnp.bfloat16), preferred_element_type=jnp.float32)
    h2 = (1.0 + eps_ref[1]) * y1 + agg2
    out_ref[...] = jnp.maximum(
        jnp.dot(h2.astype(jnp.bfloat16), w2_ref[...],
                preferred_element_type=jnp.float32) + b2_ref[...], 0.0)


def gin2_fused_pallas(x, adj, w1, b1, w2, b2, eps1, eps2, *, vmem_cap=None):
    n_pad, f_in = x.shape
    f_hid = w1.shape[1]
    f_out = w2.shape[1]
    if vmem_cap is None:
        vmem_cap = _vmem_capacity_bytes()
    eps_arr = jnp.array([eps1, eps2], dtype=jnp.float32)

    cost = pl.CostEstimate(
        flops=(2 * n_pad * n_pad * (f_in + f_hid)
               + 2 * n_pad * (f_in * f_hid + f_hid * f_out)),
        transcendentals=0,
        bytes_accessed=(adj.size * adj.dtype.itemsize
                        + x.size * x.dtype.itemsize
                        + w1.size * w1.dtype.itemsize
                        + w2.size * w2.dtype.itemsize
                        + (b1.size + b2.size) * 4
                        + n_pad * f_out * 4),
    )

    return pl.pallas_call(
        _gin2_fused_kernel,
        out_shape=jax.ShapeDtypeStruct((n_pad, f_out), jnp.float32),
        grid_spec=pltpu.PrefetchScalarGridSpec(
            num_scalar_prefetch=0,
            grid=(1,),
            in_specs=[
                pl.BlockSpec(memory_space=pltpu.SMEM),                # eps1/eps2
                pl.BlockSpec((n_pad, n_pad), lambda i: (0, 0)),       # A (bf16)
                pl.BlockSpec((n_pad, f_in), lambda i: (0, 0)),        # x
                pl.BlockSpec((f_in, f_hid), lambda i: (0, 0)),        # W1 (bf16)
                pl.BlockSpec((1, f_hid), lambda i: (0, 0)),           # b1
                pl.BlockSpec((f_hid, f_out), lambda i: (0, 0)),       # W2 (bf16)
                pl.BlockSpec((1, f_out), lambda i: (0, 0)),           # b2
            ],
            out_specs=pl.BlockSpec((n_pad, f_out), lambda i: (0, 0)),
        ),
        compiler_params=pltpu.CompilerParams(
            dimension_semantics=("arbitrary",),
            vmem_limit_bytes=_fused_vmem_limit(n_pad, f_in, f_hid, f_out, vmem_cap),
        ),
        cost_estimate=cost,
    )(eps_arr, adj, x, w1, b1, w2, b2)


# -----------------------------------------------------------------------------
# Plain-JAX glue: dense bf16 adjacency from edge_index [2, E].
# bf16 keeps integer edge multiplicities exact only up to 256 (graphs with
# > 256 parallel edges between one pair would silently round).
# -----------------------------------------------------------------------------
def edge_list_to_adj(edge_list, num_nodes, n_pad=None):
    if n_pad is None:
        n_pad = num_nodes
    src = edge_list[0]
    dst = edge_list[1]
    adj = jnp.zeros((n_pad, n_pad), dtype=jnp.float32)
    adj = adj.at[dst, src].add(1.0)        # duplicate edges accumulate (PyG sum)
    return adj.astype(jnp.bfloat16)


class GINPallas:
    """Two-layer GIN matching the reference PyTorch module."""

    def __init__(self, input_feat_dim, hidden_dim, out_dim, key, train_eps=True):
        k1, k2, k3, k4 = jax.random.split(key, 4)

        # torch.nn.Linear default init: uniform(-1/sqrt(fan_in), 1/sqrt(fan_in))
        def linear_init(kw, kb, fan_in, fan_out):
            bound = 1.0 / jnp.sqrt(jnp.float32(fan_in))
            w = jax.random.uniform(kw, (fan_in, fan_out), jnp.float32, -bound, bound)
            b = jax.random.uniform(kb, (1, fan_out), jnp.float32, -bound, bound)
            return w, b

        self.w1, self.b1 = linear_init(k1, k2, input_feat_dim, hidden_dim)
        self.w2, self.b2 = linear_init(k3, k4, hidden_dim, out_dim)
        # GINConv(train_eps=True) initializes eps to 0.0.
        self.eps1 = 0.0
        self.eps2 = 0.0
        self.input_feat_dim = input_feat_dim
        self.hidden_dim = hidden_dim
        self.out_dim = out_dim

    def __call__(self, in_feat, edge_list, *, tile=1024, mode="auto"):
        n, f_in = in_feat.shape
        f_hid, f_out = self.hidden_dim, self.out_dim
        plan = _capacity_plan()

        # Lane-dense padding: every feature axis -> multiple of 128.
        fi_p = _round_up(f_in, 128)
        fh_p = _round_up(f_hid, 128)
        fo_p = _round_up(f_out, 128)

        use_fused = (mode == "fused") or (
            mode == "auto" and n <= plan["fuse_max_nodes"])
        if use_fused:
            n_pad = _round_up(n, 128)
        else:
            tile = _pick_tile(n, tile, plan["tile_cap"], plan["dual_core"])
            n_pad = _round_up(n, tile)

        adj = edge_list_to_adj(edge_list, n, n_pad)

        # Note: padded dst rows end up as relu(b) != 0 after layer 1; this is
        # harmless because padded adjacency *columns* are zero and the final
        # slice drops padded rows.
        x = jnp.pad(in_feat, ((0, n_pad - n), (0, fi_p - f_in)))
        w1 = jnp.pad(self.w1, ((0, fi_p - f_in), (0, fh_p - f_hid))).astype(jnp.bfloat16)
        b1 = jnp.pad(self.b1, ((0, 0), (0, fh_p - f_hid)))
        w2 = jnp.pad(self.w2, ((0, fh_p - f_hid), (0, fo_p - f_out))).astype(jnp.bfloat16)
        b2 = jnp.pad(self.b2, ((0, 0), (0, fo_p - f_out)))

        if use_fused:
            out = gin2_fused_pallas(x, adj, w1, b1, w2, b2, self.eps1, self.eps2,
                                    vmem_cap=plan["vmem"])
        else:
            h = gin_conv_pallas(x, adj, w1, b1, self.eps1, tile=tile,
                                vmem_cap=plan["vmem"])
            out = gin_conv_pallas(h, adj, w2, b2, self.eps2, tile=tile,
                                  vmem_cap=plan["vmem"])
        return out[:n, :f_out]


def _reference_jax(in_feat, edge_list, model, *, match_kernel_precision=True):
    """Pure-JAX reference.

    match_kernel_precision=True replicates the kernel's precision choices
    (bf16 adjacency / bf16 matmul inputs, f32 accumulation, f32 self term);
    False is the plain f32 reference for a looser sanity check.
    """
    n = in_feat.shape[0]
    src, dst = edge_list[0], edge_list[1]
    adj = jnp.zeros((n, n), jnp.float32).at[dst, src].add(1.0)
    if match_kernel_precision:
        adj = adj.astype(jnp.bfloat16)

    def layer(x, w, b, eps):
        if match_kernel_precision:
            agg = jnp.dot(adj, x.astype(jnp.bfloat16),
                          preferred_element_type=jnp.float32)
            h = (1.0 + eps) * x + agg
            y = jnp.dot(h.astype(jnp.bfloat16), w.astype(jnp.bfloat16),
                        preferred_element_type=jnp.float32) + b
        else:
            h = (1.0 + eps) * x + adj @ x
            y = h @ w + b
        return jnp.maximum(y, 0.0)

    x = layer(in_feat, model.w1, model.b1, model.eps1)
    return layer(x, model.w2, model.b2, model.eps2)


if __name__ == "__main__":
    key = jax.random.PRNGKey(0)
    k_feat, k_edge, k_model, k_feat2, k_edge2 = jax.random.split(key, 5)

    input_feat_dim, hidden_dim, out_dim = 16, 32, 16
    model = GINPallas(input_feat_dim, hidden_dim, out_dim, key=k_model)

    # --- small graph: fused single-kernel path -------------------------------
    n1, e1 = 64, 128
    feat1 = jax.random.normal(k_feat, (n1, input_feat_dim), jnp.float32)
    edges1 = jax.random.randint(k_edge, (2, e1), 0, n1, jnp.int32)

    out1 = jax.block_until_ready(model(feat1, edges1, mode="fused"))
    ref1m = _reference_jax(feat1, edges1, model, match_kernel_precision=True)
    ref1f = _reference_jax(feat1, edges1, model, match_kernel_precision=False)
    assert out1.shape == (n1, out_dim)
    assert jnp.allclose(out1, ref1m, atol=2e-3, rtol=2e-3), \
        float(jnp.max(jnp.abs(out1 - ref1m)))
    assert jnp.allclose(out1, ref1f, atol=5e-2, rtol=5e-2), \
        float(jnp.max(jnp.abs(out1 - ref1f)))

    # --- larger graph: row/K-tiled per-layer path (reduction accumulator) ----
    n2, e2 = 300, 600
    feat2 = jax.random.normal(k_feat2, (n2, input_feat_dim), jnp.float32)
    edges2 = jax.random.randint(k_edge2, (2, e2), 0, n2, jnp.int32)

    out2 = jax.block_until_ready(model(feat2, edges2, mode="tiled", tile=128))
    ref2m = _reference_jax(feat2, edges2, model, match_kernel_precision=True)
    ref2f = _reference_jax(feat2, edges2, model, match_kernel_precision=False)
    assert out2.shape == (n2, out_dim)
    assert jnp.allclose(out2, ref2m, atol=2e-3, rtol=2e-3), \
        float(jnp.max(jnp.abs(out2 - ref2m)))
    assert jnp.allclose(out2, ref2f, atol=5e-2, rtol=5e-2), \
        float(jnp.max(jnp.abs(out2 - ref2f)))

    # --- default auto path (same small graph) --------------------------------
    out3 = jax.block_until_ready(model(feat1, edges1))
    assert jnp.allclose(out3, ref1m, atol=2e-3, rtol=2e-3)

    print("KERNEL_OK")
</pallas_src>

<mosaic_0001>
module attributes {stable_mosaic.version = 11 : i64} {
  func.func @_gin2_fused_kernel(%arg0: i32, %arg1: memref<2xf32, #tpu.memory_space<smem>>, %arg2: memref<128x128xbf16, #tpu.memory_space<vmem>>, %arg3: memref<128x128xf32, #tpu.memory_space<vmem>>, %arg4: memref<128x128xbf16, #tpu.memory_space<vmem>>, %arg5: memref<1x128xf32, #tpu.memory_space<vmem>>, %arg6: memref<128x128xbf16, #tpu.memory_space<vmem>>, %arg7: memref<1x128xf32, #tpu.memory_space<vmem>>, %arg8: memref<128x128xf32, #tpu.memory_space<vmem>>) attributes {dimension_semantics = [#tpu.dimension_semantics<arbitrary>], iteration_bounds = array<i64: 1>, scalar_prefetch = 0 : i64, scratch_operands = 0 : i64, tpu.core_type = #tpu.core_type<tc>, window_params = [{transform_indices = @transform_0, window_bounds = array<i64: 2>}, {pipeline_mode = #tpu.pipeline_mode<synchronous>, transform_indices = @transform_1, window_bounds = array<i64: 128, 128>}, {pipeline_mode = #tpu.pipeline_mode<synchronous>, transform_indices = @transform_2, window_bounds = array<i64: 128, 128>}, {pipeline_mode = #tpu.pipeline_mode<synchronous>, transform_indices = @transform_3, window_bounds = array<i64: 128, 128>}, {pipeline_mode = #tpu.pipeline_mode<synchronous>, transform_indices = @transform_4, window_bounds = array<i64: 1, 128>}, {pipeline_mode = #tpu.pipeline_mode<synchronous>, transform_indices = @transform_5, window_bounds = array<i64: 128, 128>}, {pipeline_mode = #tpu.pipeline_mode<synchronous>, transform_indices = @transform_6, window_bounds = array<i64: 1, 128>}, {pipeline_mode = #tpu.pipeline_mode<synchronous>, transform_indices = @transform_7, window_bounds = array<i64: 128, 128>}]} {
    %c0 = arith.constant 0 : index
    %c0_0 = arith.constant 0 : index
    %0 = vector.load %arg2[%c0, %c0_0] : memref<128x128xbf16, #tpu.memory_space<vmem>>, vector<128x128xbf16>
    %c0_1 = arith.constant 0 : index
    %c0_2 = arith.constant 0 : index
    %1 = vector.load %arg3[%c0_1, %c0_2] : memref<128x128xf32, #tpu.memory_space<vmem>>, vector<128x128xf32>
    %2 = arith.truncf %1 : vector<128x128xf32> to vector<128x128xbf16>
    %cst = arith.constant dense<0.000000e+00> : vector<128x128xf32>
    %3 = tpu.matmul %0, %2, %cst {dimension_numbers = #tpu.dot_dimension_numbers<[1], [0], [0], [1], [0, 0, 1, 1], [], []>} : vector<128x128xbf16>, vector<128x128xbf16>, vector<128x128xf32> -> vector<128x128xf32>
    %c0_3 = arith.constant 0 : index
    %4 = memref.load %arg1[%c0_3] : memref<2xf32, #tpu.memory_space<smem>>
    %cst_4 = arith.constant 1.000000e+00 : f32
    %5 = arith.addf %cst_4, %4 : f32
    %6 = vector.broadcast %5 : f32 to vector<128x128xf32>
    %7 = arith.mulf %6, %1 : vector<128x128xf32>
    %8 = arith.addf %7, %3 : vector<128x128xf32>
    %9 = arith.truncf %8 : vector<128x128xf32> to vector<128x128xbf16>
    %c0_5 = arith.constant 0 : index
    %c0_6 = arith.constant 0 : index
    %10 = vector.load %arg4[%c0_5, %c0_6] : memref<128x128xbf16, #tpu.memory_space<vmem>>, vector<128x128xbf16>
    %cst_7 = arith.constant dense<0.000000e+00> : vector<128x128xf32>
    %11 = tpu.matmul %9, %10, %cst_7 {dimension_numbers = #tpu.dot_dimension_numbers<[1], [0], [0], [1], [0, 0, 1, 1], [], []>} : vector<128x128xbf16>, vector<128x128xbf16>, vector<128x128xf32> -> vector<128x128xf32>
    %c0_8 = arith.constant 0 : index
    %c0_9 = arith.constant 0 : index
    %12 = vector.load %arg5[%c0_8, %c0_9] : memref<1x128xf32, #tpu.memory_space<vmem>>, vector<1x128xf32>
    %13 = vector.broadcast %12 : vector<1x128xf32> to vector<128x128xf32>
    %14 = arith.addf %11, %13 : vector<128x128xf32>
    %cst_10 = arith.constant 0.000000e+00 : f32
    %15 = vector.broadcast %cst_10 : f32 to vector<128x128xf32>
    %16 = arith.maximumf %14, %15 : vector<128x128xf32>
    %17 = arith.truncf %16 : vector<128x128xf32> to vector<128x128xbf16>
    %cst_11 = arith.constant dense<0.000000e+00> : vector<128x128xf32>
    %18 = tpu.matmul %0, %17, %cst_11 {dimension_numbers = #tpu.dot_dimension_numbers<[1], [0], [0], [1], [0, 0, 1, 1], [], []>} : vector<128x128xbf16>, vector<128x128xbf16>, vector<128x128xf32> -> vector<128x128xf32>
    %c1 = arith.constant 1 : index
    %19 = memref.load %arg1[%c1] : memref<2xf32, #tpu.memory_space<smem>>
    %cst_12 = arith.constant 1.000000e+00 : f32
    %20 = arith.addf %cst_12, %19 : f32
    %21 = vector.broadcast %20 : f32 to vector<128x128xf32>
    %22 = arith.mulf %21, %16 : vector<128x128xf32>
    %23 = arith.addf %22, %18 : vector<128x128xf32>
    %24 = arith.truncf %23 : vector<128x128xf32> to vector<128x128xbf16>
    %c0_13 = arith.constant 0 : index
    %c0_14 = arith.constant 0 : index
    %25 = vector.load %arg6[%c0_13, %c0_14] : memref<128x128xbf16, #tpu.memory_space<vmem>>, vector<128x128xbf16>
    %cst_15 = arith.constant dense<0.000000e+00> : vector<128x128xf32>
    %26 = tpu.matmul %24, %25, %cst_15 {dimension_numbers = #tpu.dot_dimension_numbers<[1], [0], [0], [1], [0, 0, 1, 1], [], []>} : vector<128x128xbf16>, vector<128x128xbf16>, vector<128x128xf32> -> vector<128x128xf32>
    %c0_16 = arith.constant 0 : index
    %c0_17 = arith.constant 0 : index
    %27 = vector.load %arg7[%c0_16, %c0_17] : memref<1x128xf32, #tpu.memory_space<vmem>>, vector<1x128xf32>
    %28 = vector.broadcast %27 : vector<1x128xf32> to vector<128x128xf32>
    %29 = arith.addf %26, %28 : vector<128x128xf32>
    %cst_18 = arith.constant 0.000000e+00 : f32
    %30 = vector.broadcast %cst_18 : f32 to vector<128x128xf32>
    %31 = arith.maximumf %29, %30 : vector<128x128xf32>
    %c0_19 = arith.constant 0 : index
    %c0_20 = arith.constant 0 : index
    %32 = vector.load %arg8[%c0_19, %c0_20] : memref<128x128xf32, #tpu.memory_space<vmem>>, vector<128x128xf32>
    tpu.vector_store %arg8[%c0_19, %c0_20], %31 {strides = array<i32>} : memref<128x128xf32, #tpu.memory_space<vmem>>, vector<128x128xf32>,
    return
  }
  func.func @transform_0(%arg0: i32) -> i32 {
    %c0_i32 = arith.constant 0 : i32
    %c0_i32_0 = arith.constant 0 : i32
    return %c0_i32 : i32
  }
  func.func @transform_1(%arg0: i32) -> (i32, i32) {
    %c0_i32 = arith.constant 0 : i32
    %c0_i32_0 = arith.constant 0 : i32
    %c0_i32_1 = arith.constant 0 : i32
    return %c0_i32, %c0_i32_0 : i32, i32
  }
  func.func @transform_2(%arg0: i32) -> (i32, i32) {
    %c0_i32 = arith.constant 0 : i32
    %c0_i32_0 = arith.constant 0 : i32
    %c0_i32_1 = arith.constant 0 : i32
    return %c0_i32, %c0_i32_0 : i32, i32
  }
  func.func @transform_3(%arg0: i32) -> (i32, i32) {
    %c0_i32 = arith.constant 0 : i32
    %c0_i32_0 = arith.constant 0 : i32
    %c0_i32_1 = arith.constant 0 : i32
    return %c0_i32, %c0_i32_0 : i32, i32
  }
  func.func @transform_4(%arg0: i32) -> (i32, i32) {
    %c0_i32 = arith.constant 0 : i32
    %c0_i32_0 = arith.constant 0 : i32
    %c0_i32_1 = arith.constant 0 : i32
    return %c0_i32, %c0_i32_0 : i32, i32
  }
  func.func @transform_5(%arg0: i32) -> (i32, i32) {
    %c0_i32 = arith.constant 0 : i32
    %c0_i32_0 = arith.constant 0 : i32
    %c0_i32_1 = arith.constant 0 : i32
    return %c0_i32, %c0_i32_0 : i32, i32
  }
  func.func @transform_6(%arg0: i32) -> (i32, i32) {
    %c0_i32 = arith.constant 0 : i32
    %c0_i32_0 = arith.constant 0 : i32
    %c0_i32_1 = arith.constant 0 : i32
    return %c0_i32, %c0_i32_0 : i32, i32
  }
  func.func @transform_7(%arg0: i32) -> (i32, i32) {
    %c0_i32 = arith.constant 0 : i32
    %c0_i32_0 = arith.constant 0 : i32
    %c0_i32_1 = arith.constant 0 : i32
    return %c0_i32, %c0_i32_0 : i32, i32
  }
}

</mosaic_0001>

<llo_original>
// kernel: tpu_custom_call.1
$region0: #{tpu_custom_call.1}
  #allocation0 [shape = 'u32[]', space=smem, size = 0x4, offset = 0x4, fixed_abs, tag = 'smem constant byte address 0x4 - core index']
  #allocation1 [shape = 'u32[144,128]{1,0:T(1,128)}', space=vmem, size = 0x12000, scoped, tag = 'internal scratch']
  %s0 = inlined_call_operand.hbm [shape: f32[2], index: 0, kind: input, shape index: {}]
  %s1 = inlined_call_operand.hbm [shape: bf16[128,128], index: 1, kind: input, shape index: {}]
  %s2 = inlined_call_operand.hbm [shape: f32[128,128], index: 2, kind: input, shape index: {}]
  %s3 = inlined_call_operand.hbm [shape: bf16[128,128], index: 3, kind: input, shape index: {}]
  %s4 = inlined_call_operand.vmem [shape: f32[1,128], index: 4, kind: input, shape index: {}]
  %s5 = inlined_call_operand.hbm [shape: bf16[128,128], index: 5, kind: input, shape index: {}]
  %s6 = inlined_call_operand.vmem [shape: f32[1,128], index: 6, kind: input, shape index: {}]
  %s7 = inlined_call_operand.hbm [shape: f32[128,128], index: 7, kind: output, shape index: {}]
  %s8 = sld [smem:[#allocation0]]
  $region58: #{tpu_custom_call.1} parent=0
    _
  %s10 = ssub.s32 1, %s8
  %s11 = scalar_select 0, %s10, %s8
  $region1: #{tpu_custom_call.1} parent=0
    #allocation2 [shape = 'u8[512]{0}', space=smem, size = 0x200, scoped, tag = 'input window, operand 0, single buffered']
    #allocation3 [shape = 's32[1]{0}', space=sflag, size = 0x4, scoped, tag = 'scoped memory for tpu_custom_call.1']
    #allocation4 [shape = 's32[1]{0}', space=sflag, size = 0x4, scoped, tag = 'scoped memory for tpu_custom_call.1']
    #allocation5 [shape = 's32[1]{0}', space=sflag, size = 0x4, scoped, tag = 'scoped memory for tpu_custom_call.1']
    #allocation6 [shape = 'u8[32768]{0}', space=vmem, size = 0x8000, scoped, tag = 'input window, operand 1, single buffered']
    #allocation7 [shape = 'u8[65536]{0}', space=vmem, size = 0x10000, scoped, tag = 'input window, operand 2, single buffered']
    #allocation8 [shape = 's32[1]{0}', space=sflag, size = 0x4, scoped, tag = 'scoped memory for tpu_custom_call.1']
    #allocation9 [shape = 'u8[32768]{0}', space=vmem, size = 0x8000, scoped, tag = 'input window, operand 3, single buffered']
    #allocation10 [shape = 'u8[32768]{0}', space=vmem, size = 0x8000, scoped, tag = 'input window, operand 5, single buffered']
    #allocation11 [shape = 's32[1]{0}', space=sflag, size = 0x4, scoped, tag = 'scoped memory for tpu_custom_call.1']
    #allocation12 [shape = 'u8[65536]{0}', space=vmem, size = 0x10000, scoped, tag = 'output window, operand 0, single buffered']
    %12 = vsyncpa [#allocation5], 0
    %13 = vsyncpa [#allocation3], 0
    %14 = vsyncpa [#allocation8], 0
    %15 = vsyncpa [#allocation11], 0
    %16 = vsyncpa [#allocation4], 0
    // Predicated region
    $region2: #{tpu_custom_call.1} parent=1 // pred_check
      _
    $region3: #{tpu_custom_call.1} parent=1 // pred_check_branch
      %18 = sbr.rel (0) target = $region5
    $region4: #{tpu_custom_call.1} parent=1 // pred_region
      %s20 = ssub.s32 16, 16
      %21 = vsyncadd [#allocation5], %s20
      %24 = dma.hbm_to_smem %s0, 16, [#allocation2], [#allocation5]
    $region5: #{tpu_custom_call.1} parent=1 // pred_fallthru
      _
    // Predicated region
    $region6: #{tpu_custom_call.1} parent=1 // pred_check
      _
    $region7: #{tpu_custom_call.1} parent=1 // pred_check_branch
      %26 = sbr.rel (0) target = $region9
    $region8: #{tpu_custom_call.1} parent=1 // pred_region
      %s28 = ssub.s32 1024, 1024
      %29 = vsyncadd [#allocation3], %s28
      %s30 = sshll.u32 [#allocation6], 4
      %s31 = int_to_ptr.vmem [resolvable:$true] %s30
      %36 = dma.hbm_to_vmem [thread:$0]  %s1, 1024, %s31, [#allocation3], 64, 64, 4
    $region9: #{tpu_custom_call.1} parent=1 // pred_fallthru
      _
    // Predicated region
    $region10: #{tpu_custom_call.1} parent=1 // pred_check
      _
    $region11: #{tpu_custom_call.1} parent=1 // pred_check_branch
      %38 = sbr.rel (0) target = $region13
    $region12: #{tpu_custom_call.1} parent=1 // pred_region
      %s40 = ssub.s32 2048, 2048
      %41 = vsyncadd [#allocation8], %s40
      %s42 = sshll.u32 [#allocation7], 4
      %s43 = int_to_ptr.vmem [resolvable:$true] %s42
      %48 = dma.hbm_to_vmem [thread:$0]  %s2, 2048, %s43, [#allocation8], 128, 128, 8
    $region13: #{tpu_custom_call.1} parent=1 // pred_fallthru
      _
    // Predicated region
    $region14: #{tpu_custom_call.1} parent=1 // pred_check
      _
    $region15: #{tpu_custom_call.1} parent=1 // pred_check_branch
      %50 = sbr.rel (0) target = $region17
    $region16: #{tpu_custom_call.1} parent=1 // pred_region
      %s52 = ssub.s32 1024, 1024
      %53 = vsyncadd [#allocation8], %s52
      %s54 = sshll.u32 [#allocation9], 4
      %s55 = int_to_ptr.vmem [resolvable:$true] %s54
      %60 = dma.hbm_to_vmem [thread:$0]  %s3, 1024, %s55, [#allocation8], 64, 64, 4
    $region17: #{tpu_custom_call.1} parent=1 // pred_fallthru
      _
    // Predicated region
    $region18: #{tpu_custom_call.1} parent=1 // pred_check
      _
    $region19: #{tpu_custom_call.1} parent=1 // pred_check_branch
      %62 = sbr.rel (0) target = $region21
    $region20: #{tpu_custom_call.1} parent=1 // pred_region
      _
    $region21: #{tpu_custom_call.1} parent=1 // pred_fallthru
      _
    // Predicated region
    $region22: #{tpu_custom_call.1} parent=1 // pred_check
      _
    $region23: #{tpu_custom_call.1} parent=1 // pred_check_branch
      %64 = sbr.rel (0) target = $region25
    $region24: #{tpu_custom_call.1} parent=1 // pred_region
      %s66 = ssub.s32 1024, 1024
      %67 = vsyncadd [#allocation11], %s66
      %s68 = sshll.u32 [#allocation10], 4
      %s69 = int_to_ptr.vmem [resolvable:$true] %s68
      %74 = dma.hbm_to_vmem [thread:$0]  %s5, 1024, %s69, [#allocation11], 64, 64, 4
    $region25: #{tpu_custom_call.1} parent=1 // pred_fallthru
      _
    // Predicated region
    $region26: #{tpu_custom_call.1} parent=1 // pred_check
      _
    $region27: #{tpu_custom_call.1} parent=1 // pred_check_branch
      %76 = sbr.rel (0) target = $region29
    $region28: #{tpu_custom_call.1} parent=1 // pred_region
      _
    $region29: #{tpu_custom_call.1} parent=1 // pred_fallthru
      _
    // Predicated region
    $region30: #{tpu_custom_call.1} parent=1 // pred_check
      _
    $region31: #{tpu_custom_call.1} parent=1 // pred_check_branch
      %78 = sbr.rel (0) target = $region33
    $region32: #{tpu_custom_call.1} parent=1 // pred_region
      %79 = dma.done [#allocation5], 16
    $region33: #{tpu_custom_call.1} parent=1 // pred_fallthru
      _
    // Predicated region
    $region34: #{tpu_custom_call.1} parent=1 // pred_check
      _
    $region35: #{tpu_custom_call.1} parent=1 // pred_check_branch
      %81 = sbr.rel (0) target = $region37
    $region36: #{tpu_custom_call.1} parent=1 // pred_region
      %82 = dma.done [#allocation3], 1024
    $region37: #{tpu_custom_call.1} parent=1 // pred_fallthru
      _
    // Predicated region
    $region38: #{tpu_custom_call.1} parent=1 // pred_check
      _
    $region39: #{tpu_custom_call.1} parent=1 // pred_check_branch
      %84 = sbr.rel (0) target = $region41
    $region40: #{tpu_custom_call.1} parent=1 // pred_region
      %85 = dma.done [#allocation8], 2048
    $region41: #{tpu_custom_call.1} parent=1 // pred_fallthru
      _
    // Predicated region
    $region42: #{tpu_custom_call.1} parent=1 // pred_check
      _
    $region43: #{tpu_custom_call.1} parent=1 // pred_check_branch
      %87 = sbr.rel (0) target = $region45
    $region44: #{tpu_custom_call.1} parent=1 // pred_region
      %88 = dma.done [#allocation8], 1024
    $region45: #{tpu_custom_call.1} parent=1 // pred_fallthru
      _
    // Predicated region
    $region46: #{tpu_custom_call.1} parent=1 // pred_check
      _
    $region47: #{tpu_custom_call.1} parent=1 // pred_check_branch
      %90 = sbr.rel (0) target = $region49
    $region48: #{tpu_custom_call.1} parent=1 // pred_region
      %91 = dma.done [#allocation11], 1024
    $region49: #{tpu_custom_call.1} parent=1 // pred_fallthru
      _
    %92 = sfence
    %v94 = vld [vmem:[#allocation6] sm:$0xf]
    %v95 = vld [vmem:[#allocation6 + $0x4] sm:$0xf]
    %v96 = vld [vmem:[#allocation6 + $0x8] sm:$0xf]
    %v97 = vld [vmem:[#allocation6 + $0xc] sm:$0xf]
    %v98 = vld [vmem:[#allocation6 + $0x10] sm:$0xf]
    %v99 = vld [vmem:[#allocation6 + $0x14] sm:$0xf]
    %v100 = vld [vmem:[#allocation6 + $0x18] sm:$0xf]
    %v101 = vld [vmem:[#allocation6 + $0x1c] sm:$0xf]
    %v102 = vld [vmem:[#allocation6 + $0x20] sm:$0xf]
    %v103 = vld [vmem:[#allocation6 + $0x24] sm:$0xf]
    %v104 = vld [vmem:[#allocation6 + $0x28] sm:$0xf]
    %v105 = vld [vmem:[#allocation6 + $0x2c] sm:$0xf]
    %v106 = vld [vmem:[#allocation6 + $0x30] sm:$0xf]
    %v107 = vld [vmem:[#allocation6 + $0x34] sm:$0xf]
    %v108 = vld [vmem:[#allocation6 + $0x38] sm:$0xf]
    %v109 = vld [vmem:[#allocation6 + $0x3c] sm:$0xf]
    %v110 = vld [vmem:[#allocation7] sm:$0xff]
    %v111 = vld [vmem:[#allocation7 + $0x8] sm:$0xff]
    %v112 = vld [vmem:[#allocation7 + $0x10] sm:$0xff]
    %v113 = vld [vmem:[#allocation7 + $0x18] sm:$0xff]
    %v114 = vld [vmem:[#allocation7 + $0x20] sm:$0xff]
    %v115 = vld [vmem:[#allocation7 + $0x28] sm:$0xff]
    %v116 = vld [vmem:[#allocation7 + $0x30] sm:$0xff]
    %v117 = vld [vmem:[#allocation7 + $0x38] sm:$0xff]
    %v118 = vld [vmem:[#allocation7 + $0x40] sm:$0xff]
    %v119 = vld [vmem:[#allocation7 + $0x48] sm:$0xff]
    %v120 = vld [vmem:[#allocation7 + $0x50] sm:$0xff]
    %v121 = vld [vmem:[#allocation7 + $0x58] sm:$0xff]
    %v122 = vld [vmem:[#allocation7 + $0x60] sm:$0xff]
    %v123 = vld [vmem:[#allocation7 + $0x68] sm:$0xff]
    %v124 = vld [vmem:[#allocation7 + $0x70] sm:$0xff]
    %v125 = vld [vmem:[#allocation7 + $0x78] sm:$0xff]
    %v126 = vpack.c.bf16 %v111, %v110
    %v127 = vpack.c.bf16 %v113, %v112
    %v128 = vpack.c.bf16 %v115, %v114
    %v129 = vpack.c.bf16 %v117, %v116
    %v130 = vpack.c.bf16 %v119, %v118
    %v131 = vpack.c.bf16 %v121, %v120
    %v132 = vpack.c.bf16 %v123, %v122
    %v133 = vpack.c.bf16 %v125, %v124
    %v150 = vunpack.c.l.b16 %v94
    %v151 = vunpack.c.l.b16 %v95
    %v152 = vunpack.c.l.b16 %v96
    %v153 = vunpack.c.l.b16 %v97
    %v154 = vunpack.c.l.b16 %v98
    %v155 = vunpack.c.l.b16 %v99
    %v156 = vunpack.c.l.b16 %v100
    %v157 = vunpack.c.l.b16 %v101
    %v158 = vunpack.c.l.b16 %v102
    %v159 = vunpack.c.l.b16 %v103
    %v160 = vunpack.c.l.b16 %v104
    %v161 = vunpack.c.l.b16 %v105
    %v162 = vunpack.c.l.b16 %v106
    %v163 = vunpack.c.l.b16 %v107
    %v164 = vunpack.c.l.b16 %v108
    %v165 = vunpack.c.l.b16 %v109
    %v166 = vpack.c.b16 %v151, %v150
    %v167 = vpack.c.b16 %v153, %v152
    %v168 = vpack.c.b16 %v155, %v154
    %v169 = vpack.c.b16 %v157, %v156
    %v170 = vpack.c.b16 %v159, %v158
    %v171 = vpack.c.b16 %v161, %v160
    %v172 = vpack.c.b16 %v163, %v162
    %v173 = vpack.c.b16 %v165, %v164
    %182 = vmatprep.subr.bf16.mxu0 0
    %183 = vmatpush1.bf16.msra.mxu0 %v126
    %184 = vmatprep.subr.bf16.mxu0 0
    %185 = vmatpush1.bf16.msra.mxu0 %v127
    %186 = vmatprep.subr.bf16.mxu0 0
    %187 = vmatpush1.bf16.msra.mxu0 %v128
    %188 = vmatprep.subr.bf16.mxu0 0
    %189 = vmatpush1.bf16.msra.mxu0 %v129
    %190 = vmatprep.subr.bf16.mxu0 0
    %191 = vmatpush1.bf16.msra.mxu0 %v130
    %192 = vmatprep.subr.bf16.mxu0 0
    %193 = vmatpush1.bf16.msra.mxu0 %v131
    %194 = vmatprep.subr.bf16.mxu0 0
    %195 = vmatpush1.bf16.msra.mxu0 %v132
    %196 = vmatprep.subr.bf16.mxu0 0
    %197 = vmatpush1.bf16.msra.mxu0 %v133
    %198 = vmatprep.subr.bf16.mxu0 0
    %199 = vmatpush1.bf16.msra.mxu0 0
    %200 = vmatprep.subr.bf16.mxu0 0
    %201 = vmatpush1.bf16.msra.mxu0 0
    %202 = vmatprep.subr.bf16.mxu0 0
    %203 = vmatpush1.bf16.msra.mxu0 0
    %204 = vmatprep.subr.bf16.mxu0 0
    %205 = vmatpush1.bf16.msra.mxu0 0
    %206 = vmatprep.subr.bf16.mxu0 0
    %207 = vmatpush1.bf16.msra.mxu0 0
    %208 = vmatprep.subr.bf16.mxu0 0
    %209 = vmatpush1.bf16.msra.mxu0 0
    %210 = vmatprep.subr.bf16.mxu0 0
    %211 = vmatpush1.bf16.msra.mxu0 0
    %212 = vmatprep.subr.bf16.mxu0 0
    %213 = vmatpush1.bf16.msra.mxu0 0
    %214 = vmatprep.mubr.bf16.mxu0 0
    %215 = vmatmul.mubr.bf16.gmra.mrb[0].mxu0 %v166
    %v216 = vpop.f32.mrb[0].mxu0
    %v217 = vadd.f32 0.0, %v216
    %v218 = vpop.f32.mrb[0].mxu0
    %v219 = vpop.f32.mrb[0].mxu0
    %v220 = vadd.f32 0.0, %v219
    %v221 = vpop.f32.mrb[0].mxu0
    %222 = vmatprep.mubr.bf16.mxu0 0
    %223 = vmatmul.mubr.bf16.gmra.mrb[0].mxu0 %v167
    %v224 = vpop.f32.mrb[0].mxu0
    %v225 = vadd.f32 0.0, %v224
    %v226 = vpop.f32.mrb[0].mxu0
    %v227 = vpop.f32.mrb[0].mxu0
    %v228 = vadd.f32 0.0, %v227
    %v229 = vpop.f32.mrb[0].mxu0
    %230 = vmatprep.mubr.bf16.mxu0 0
    %231 = vmatmul.mubr.bf16.gmra.mrb[0].mxu0 %v168
    %v232 = vpop.f32.mrb[0].mxu0
    %v233 = vadd.f32 0.0, %v232
    %v234 = vpop.f32.mrb[0].mxu0
    %v235 = vpop.f32.mrb[0].mxu0
    %v236 = vadd.f32 0.0, %v235
    %v237 = vpop.f32.mrb[0].mxu0
    %238 = vmatprep.mubr.bf16.mxu0 0
    %239 = vmatmul.mubr.bf16.gmra.mrb[0].mxu0 %v169
    %v240 = vpop.f32.mrb[0].mxu0
    %v241 = vadd.f32 0.0, %v240
    %v242 = vpop.f32.mrb[0].mxu0
    %v243 = vpop.f32.mrb[0].mxu0
    %v244 = vadd.f32 0.0, %v243
    %v245 = vpop.f32.mrb[0].mxu0
    %246 = vmatprep.mubr.bf16.mxu0 0
    %247 = vmatmul.mubr.bf16.gmra.mrb[0].mxu0 %v170
    %v248 = vpop.f32.mrb[0].mxu0
    %v249 = vadd.f32 0.0, %v248
    %v250 = vpop.f32.mrb[0].mxu0
    %v251 = vpop.f32.mrb[0].mxu0
    %v252 = vadd.f32 0.0, %v251
    %v253 = vpop.f32.mrb[0].mxu0
    %254 = vmatprep.mubr.bf16.mxu0 0
    %255 = vmatmul.mubr.bf16.gmra.mrb[0].mxu0 %v171
    %v256 = vpop.f32.mrb[0].mxu0
    %v257 = vadd.f32 0.0, %v256
    %v258 = vpop.f32.mrb[0].mxu0
    %v259 = vpop.f32.mrb[0].mxu0
    %v260 = vadd.f32 0.0, %v259
    %v261 = vpop.f32.mrb[0].mxu0
    %262 = vmatprep.mubr.bf16.mxu0 0
    %263 = vmatmul.mubr.bf16.gmra.mrb[0].mxu0 %v172
    %v264 = vpop.f32.mrb[0].mxu0
    %v265 = vadd.f32 0.0, %v264
    %v266 = vpop.f32.mrb[0].mxu0
    %v267 = vpop.f32.mrb[0].mxu0
    %v268 = vadd.f32 0.0, %v267
    %v269 = vpop.f32.mrb[0].mxu0
    %270 = vmatprep.mubr.bf16.mxu0 0
    %271 = vmatmul.mubr.bf16.gmra.mrb[0].mxu0 %v173
    %v272 = vpop.f32.mrb[0].mxu0
    %v273 = vadd.f32 0.0, %v272
    %v274 = vpop.f32.mrb[0].mxu0
    %v275 = vpop.f32.mrb[0].mxu0
    %v276 = vadd.f32 0.0, %v275
    %v277 = vpop.f32.mrb[0].mxu0
    %278 = vdwg.mxu0
    %s279 = sld [smem:[#allocation2]]
    %s280 = sadd.f32 %s279, 1.0
    %v281 = vstv %s280
    %v282 = vmul.f32 %v281, %v110
    %v283 = vmul.f32 %v281, %v111
    %v284 = vmul.f32 %v281, %v112
    %v285 = vmul.f32 %v281, %v113
    %v286 = vmul.f32 %v281, %v114
    %v287 = vmul.f32 %v281, %v115
    %v288 = vmul.f32 %v281, %v116
    %v289 = vmul.f32 %v281, %v117
    %v290 = vmul.f32 %v281, %v118
    %v291 = vmul.f32 %v281, %v119
    %v292 = vmul.f32 %v281, %v120
    %v293 = vmul.f32 %v281, %v121
    %v294 = vmul.f32 %v281, %v122
    %v295 = vmul.f32 %v281, %v123
    %v296 = vmul.f32 %v281, %v124
    %v297 = vmul.f32 %v281, %v125
    %v298 = vadd.f32 %v282, %v217
    %v299 = vadd.f32 %v283, %v220
    %v300 = vadd.f32 %v284, %v225
    %v301 = vadd.f32 %v285, %v228
    %v302 = vadd.f32 %v286, %v233
    %v303 = vadd.f32 %v287, %v236
    %v304 = vadd.f32 %v288, %v241
    %v305 = vadd.f32 %v289, %v244
    %v306 = vadd.f32 %v290, %v249
    %v307 = vadd.f32 %v291, %v252
    %v308 = vadd.f32 %v292, %v257
    %v309 = vadd.f32 %v293, %v260
    %v310 = vadd.f32 %v294, %v265
    %v311 = vadd.f32 %v295, %v268
    %v312 = vadd.f32 %v296, %v273
    %v313 = vadd.f32 %v297, %v276
    %v314 = vpack.c.bf16 %v299, %v298
    %v315 = vpack.c.bf16 %v301, %v300
    %v316 = vpack.c.bf16 %v303, %v302
    %v317 = vpack.c.bf16 %v305, %v304
    %v318 = vpack.c.bf16 %v307, %v306
    %v319 = vpack.c.bf16 %v309, %v308
    %v320 = vpack.c.bf16 %v311, %v310
    %v321 = vpack.c.bf16 %v313, %v312
    %v322 = vld [vmem:[#allocation9] sm:$0xf]
    %v323 = vld [vmem:[#allocation9 + $0x4] sm:$0xf]
    %v324 = vld [vmem:[#allocation9 + $0x8] sm:$0xf]
    %v325 = vld [vmem:[#allocation9 + $0xc] sm:$0xf]
    %v326 = vld [vmem:[#allocation9 + $0x10] sm:$0xf]
    %v327 = vld [vmem:[#allocation9 + $0x14] sm:$0xf]
    %v328 = vld [vmem:[#allocation9 + $0x18] sm:$0xf]
    %v329 = vld [vmem:[#allocation9 + $0x1c] sm:$0xf]
    %v330 = vld [vmem:[#allocation9 + $0x20] sm:$0xf]
    %v331 = vld [vmem:[#allocation9 + $0x24] sm:$0xf]
    %v332 = vld [vmem:[#allocation9 + $0x28] sm:$0xf]
    %v333 = vld [vmem:[#allocation9 + $0x2c] sm:$0xf]
    %v334 = vld [vmem:[#allocation9 + $0x30] sm:$0xf]
    %v335 = vld [vmem:[#allocation9 + $0x34] sm:$0xf]
    %v336 = vld [vmem:[#allocation9 + $0x38] sm:$0xf]
    %v337 = vld [vmem:[#allocation9 + $0x3c] sm:$0xf]
    %v338 = vld [vmem:[%s4] sm:$0x1]
    %v340 = vlaneseq
    %v341 = vshrl.u32 %v340, 7
    %v342 = vsub.s32 0, %v341
    %v343 = vrot.slane %v338, %v342
    %v361 = vunpack.c.l.b16 %v322
    %v362 = vunpack.c.l.b16 %v323
    %v363 = vunpack.c.l.b16 %v324
    %v364 = vunpack.c.l.b16 %v325
    %v365 = vunpack.c.l.b16 %v326
    %v366 = vunpack.c.l.b16 %v327
    %v367 = vunpack.c.l.b16 %v328
    %v368 = vunpack.c.l.b16 %v329
    %v369 = vunpack.c.l.b16 %v330
    %v370 = vunpack.c.l.b16 %v331
    %v371 = vunpack.c.l.b16 %v332
    %v372 = vunpack.c.l.b16 %v333
    %v373 = vunpack.c.l.b16 %v334
    %v374 = vunpack.c.l.b16 %v335
    %v375 = vunpack.c.l.b16 %v336
    %v376 = vunpack.c.l.b16 %v337
    %v377 = vpack.c.b16 %v362, %v361
    %v378 = vpack.c.b16 %v364, %v363
    %v379 = vpack.c.b16 %v366, %v365
    %v380 = vpack.c.b16 %v368, %v367
    %v381 = vpack.c.b16 %v370, %v369
    %v382 = vpack.c.b16 %v372, %v371
    %v383 = vpack.c.b16 %v374, %v373
    %v384 = vpack.c.b16 %v376, %v375
    %393 = vmatprep.subr.bf16.mxu0 0
    %394 = vmatpush1.bf16.msra.mxu0 %v377
    %395 = vmatprep.subr.bf16.mxu0 0
    %396 = vmatpush1.bf16.msra.mxu0 %v378
    %397 = vmatprep.subr.bf16.mxu0 0
    %398 = vmatpush1.bf16.msra.mxu0 %v379
    %399 = vmatprep.subr.bf16.mxu0 0
    %400 = vmatpush1.bf16.msra.mxu0 %v380
    %401 = vmatprep.subr.bf16.mxu0 0
    %402 = vmatpush1.bf16.msra.mxu0 %v381
    %403 = vmatprep.subr.bf16.mxu0 0
    %404 = vmatpush1.bf16.msra.mxu0 %v382
    %405 = vmatprep.subr.bf16.mxu0 0
    %406 = vmatpush1.bf16.msra.mxu0 %v383
    %407 = vmatprep.subr.bf16.mxu0 0
    %408 = vmatpush1.bf16.msra.mxu0 %v384
    %409 = vmatprep.subr.bf16.mxu0 0
    %410 = vmatpush1.bf16.msra.mxu0 0
    %411 = vmatprep.subr.bf16.mxu0 0
    %412 = vmatpush1.bf16.msra.mxu0 0
    %413 = vmatprep.subr.bf16.mxu0 0
    %414 = vmatpush1.bf16.msra.mxu0 0
    %415 = vmatprep.subr.bf16.mxu0 0
    %416 = vmatpush1.bf16.msra.mxu0 0
    %417 = vmatprep.subr.bf16.mxu0 0
    %418 = vmatpush1.bf16.msra.mxu0 0
    %419 = vmatprep.subr.bf16.mxu0 0
    %420 = vmatpush1.bf16.msra.mxu0 0
    %421 = vmatprep.subr.bf16.mxu0 0
    %422 = vmatpush1.bf16.msra.mxu0 0
    %423 = vmatprep.subr.bf16.mxu0 0
    %424 = vmatpush1.bf16.msra.mxu0 0
    %425 = vmatprep.mubr.bf16.mxu0 0
    %426 = vmatmul.mubr.bf16.gmra.mrb[0].mxu0 %v314
    %v427 = vpop.f32.mrb[0].mxu0
    %v428 = vadd.f32 %v343, %v427
    %v429 = vpop.f32.mrb[0].mxu0
    %v430 = vpop.f32.mrb[0].mxu0
    %v431 = vadd.f32 %v343, %v430
    %v432 = vpop.f32.mrb[0].mxu0
    %433 = vmatprep.mubr.bf16.mxu0 0
    %434 = vmatmul.mubr.bf16.gmra.mrb[0].mxu0 %v315
    %v435 = vpop.f32.mrb[0].mxu0
    %v436 = vadd.f32 %v343, %v435
    %v437 = vpop.f32.mrb[0].mxu0
    %v438 = vpop.f32.mrb[0].mxu0
    %v439 = vadd.f32 %v343, %v438
    %v440 = vpop.f32.mrb[0].mxu0
    %441 = vmatprep.mubr.bf16.mxu0 0
    %442 = vmatmul.mubr.bf16.gmra.mrb[0].mxu0 %v316
    %v443 = vpop.f32.mrb[0].mxu0
    %v444 = vadd.f32 %v343, %v443
    %v445 = vpop.f32.mrb[0].mxu0
    %v446 = vpop.f32.mrb[0].mxu0
    %v447 = vadd.f32 %v343, %v446
    %v448 = vpop.f32.mrb[0].mxu0
    %449 = vmatprep.mubr.bf16.mxu0 0
    %450 = vmatmul.mubr.bf16.gmra.mrb[0].mxu0 %v317
    %v451 = vpop.f32.mrb[0].mxu0
    %v452 = vadd.f32 %v343, %v451
    %v453 = vpop.f32.mrb[0].mxu0
    %v454 = vpop.f32.mrb[0].mxu0
    %v455 = vadd.f32 %v343, %v454
    %v456 = vpop.f32.mrb[0].mxu0
    %457 = vmatprep.mubr.bf16.mxu0 0
    %458 = vmatmul.mubr.bf16.gmra.mrb[0].mxu0 %v318
    %v459 = vpop.f32.mrb[0].mxu0
    %v460 = vadd.f32 %v343, %v459
    %v461 = vpop.f32.mrb[0].mxu0
    %v462 = vpop.f32.mrb[0].mxu0
    %v463 = vadd.f32 %v343, %v462
    %v464 = vpop.f32.mrb[0].mxu0
    %465 = vmatprep.mubr.bf16.mxu0 0
    %466 = vmatmul.mubr.bf16.gmra.mrb[0].mxu0 %v319
    %v467 = vpop.f32.mrb[0].mxu0
    %v468 = vadd.f32 %v343, %v467
    %v469 = vpop.f32.mrb[0].mxu0
    %v470 = vpop.f32.mrb[0].mxu0
    %v471 = vadd.f32 %v343, %v470
    %v472 = vpop.f32.mrb[0].mxu0
    %473 = vmatprep.mubr.bf16.mxu0 0
    %474 = vmatmul.mubr.bf16.gmra.mrb[0].mxu0 %v320
    %v475 = vpop.f32.mrb[0].mxu0
    %v476 = vadd.f32 %v343, %v475
    %v477 = vpop.f32.mrb[0].mxu0
    %v478 = vpop.f32.mrb[0].mxu0
    %v479 = vadd.f32 %v343, %v478
    %v480 = vpop.f32.mrb[0].mxu0
    %481 = vmatprep.mubr.bf16.mxu0 0
    %482 = vmatmul.mubr.bf16.gmra.mrb[0].mxu0 %v321
    %v483 = vpop.f32.mrb[0].mxu0
    %v484 = vadd.f32 %v343, %v483
    %v485 = vpop.f32.mrb[0].mxu0
    %v486 = vpop.f32.mrb[0].mxu0
    %v487 = vadd.f32 %v343, %v486
    %v488 = vpop.f32.mrb[0].mxu0
    %489 = vdwg.mxu0
    %v490 = vmax.f32 %v428, 0.0
    %v491 = vmax.f32 %v431, 0.0
    %v492 = vmax.f32 %v436, 0.0
    %v493 = vmax.f32 %v439, 0.0
    %v494 = vmax.f32 %v444, 0.0
    %v495 = vmax.f32 %v447, 0.0
    %v496 = vmax.f32 %v452, 0.0
    %v497 = vmax.f32 %v455, 0.0
    %v498 = vmax.f32 %v460, 0.0
    %v499 = vmax.f32 %v463, 0.0
    %v500 = vmax.f32 %v468, 0.0
    %v501 = vmax.f32 %v471, 0.0
    %v502 = vmax.f32 %v476, 0.0
    %v503 = vmax.f32 %v479, 0.0
    %v504 = vmax.f32 %v484, 0.0
    %v505 = vmax.f32 %v487, 0.0
    %v506 = vpack.c.bf16 %v491, %v490
    %v507 = vpack.c.bf16 %v493, %v492
    %v508 = vpack.c.bf16 %v495, %v494
    %v509 = vpack.c.bf16 %v497, %v496
    %v510 = vpack.c.bf16 %v499, %v498
    %v511 = vpack.c.bf16 %v501, %v500
    %v512 = vpack.c.bf16 %v503, %v502
    %v513 = vpack.c.bf16 %v505, %v504
    %514 = vmatprep.subr.bf16.mxu0 0
    %515 = vmatpush1.bf16.msra.mxu0 %v506
    %516 = vmatprep.subr.bf16.mxu0 0
    %517 = vmatpush1.bf16.msra.mxu0 %v507
    %518 = vmatprep.subr.bf16.mxu0 0
    %519 = vmatpush1.bf16.msra.mxu0 %v508
    %520 = vmatprep.subr.bf16.mxu0 0
    %521 = vmatpush1.bf16.msra.mxu0 %v509
    %522 = vmatprep.subr.bf16.mxu0 0
    %523 = vmatpush1.bf16.msra.mxu0 %v510
    %524 = vmatprep.subr.bf16.mxu0 0
    %525 = vmatpush1.bf16.msra.mxu0 %v511
    %526 = vmatprep.subr.bf16.mxu0 0
    %527 = vmatpush1.bf16.msra.mxu0 %v512
    %528 = vmatprep.subr.bf16.mxu0 0
    %529 = vmatpush1.bf16.msra.mxu0 %v513
    %530 = vmatprep.subr.bf16.mxu0 0
    %531 = vmatpush1.bf16.msra.mxu0 0
    %532 = vmatprep.subr.bf16.mxu0 0
    %533 = vmatpush1.bf16.msra.mxu0 0
    %534 = vmatprep.subr.bf16.mxu0 0
    %535 = vmatpush1.bf16.msra.mxu0 0
    %536 = vmatprep.subr.bf16.mxu0 0
    %537 = vmatpush1.bf16.msra.mxu0 0
    %538 = vmatprep.subr.bf16.mxu0 0
    %539 = vmatpush1.bf16.msra.mxu0 0
    %540 = vmatprep.subr.bf16.mxu0 0
    %541 = vmatpush1.bf16.msra.mxu0 0
    %542 = vmatprep.subr.bf16.mxu0 0
    %543 = vmatpush1.bf16.msra.mxu0 0
    %544 = vmatprep.subr.bf16.mxu0 0
    %545 = vmatpush1.bf16.msra.mxu0 0
    %546 = vmatprep.mubr.bf16.mxu0 0
    %547 = vmatmul.mubr.bf16.gmra.mrb[0].mxu0 %v166
    %v548 = vpop.f32.mrb[0].mxu0
    %v549 = vadd.f32 0.0, %v548
    %v550 = vpop.f32.mrb[0].mxu0
    %v551 = vpop.f32.mrb[0].mxu0
    %v552 = vadd.f32 0.0, %v551
    %v553 = vpop.f32.mrb[0].mxu0
    %554 = vmatprep.mubr.bf16.mxu0 0
    %555 = vmatmul.mubr.bf16.gmra.mrb[0].mxu0 %v167
    %v556 = vpop.f32.mrb[0].mxu0
    %v557 = vadd.f32 0.0, %v556
    %v558 = vpop.f32.mrb[0].mxu0
    %v559 = vpop.f32.mrb[0].mxu0
    %v560 = vadd.f32 0.0, %v559
    %v561 = vpop.f32.mrb[0].mxu0
    %562 = vmatprep.mubr.bf16.mxu0 0
    %563 = vmatmul.mubr.bf16.gmra.mrb[0].mxu0 %v168
    %v564 = vpop.f32.mrb[0].mxu0
    %v565 = vadd.f32 0.0, %v564
    %v566 = vpop.f32.mrb[0].mxu0
    %v567 = vpop.f32.mrb[0].mxu0
    %v568 = vadd.f32 0.0, %v567
    %v569 = vpop.f32.mrb[0].mxu0
    %570 = vmatprep.mubr.bf16.mxu0 0
    %571 = vmatmul.mubr.bf16.gmra.mrb[0].mxu0 %v169
    %v572 = vpop.f32.mrb[0].mxu0
    %v573 = vadd.f32 0.0, %v572
    %v574 = vpop.f32.mrb[0].mxu0
    %v575 = vpop.f32.mrb[0].mxu0
    %v576 = vadd.f32 0.0, %v575
    %v577 = vpop.f32.mrb[0].mxu0
    %578 = vmatprep.mubr.bf16.mxu0 0
    %579 = vmatmul.mubr.bf16.gmra.mrb[0].mxu0 %v170
    %v580 = vpop.f32.mrb[0].mxu0
    %v581 = vadd.f32 0.0, %v580
    %v582 = vpop.f32.mrb[0].mxu0
    %v583 = vpop.f32.mrb[0].mxu0
    %v584 = vadd.f32 0.0, %v583
    %v585 = vpop.f32.mrb[0].mxu0
    %586 = vmatprep.mubr.bf16.mxu0 0
    %587 = vmatmul.mubr.bf16.gmra.mrb[0].mxu0 %v171
    %v588 = vpop.f32.mrb[0].mxu0
    %v589 = vadd.f32 0.0, %v588
    %v590 = vpop.f32.mrb[0].mxu0
    %v591 = vpop.f32.mrb[0].mxu0
    %v592 = vadd.f32 0.0, %v591
    %v593 = vpop.f32.mrb[0].mxu0
    %594 = vmatprep.mubr.bf16.mxu0 0
    %595 = vmatmul.mubr.bf16.gmra.mrb[0].mxu0 %v172
    %v596 = vpop.f32.mrb[0].mxu0
    %v597 = vadd.f32 0.0, %v596
    %v598 = vpop.f32.mrb[0].mxu0
    %v599 = vpop.f32.mrb[0].mxu0
    %v600 = vadd.f32 0.0, %v599
    %v601 = vpop.f32.mrb[0].mxu0
    %602 = vmatprep.mubr.bf16.mxu0 0
    %603 = vmatmul.mubr.bf16.gmra.mrb[0].mxu0 %v173
    %v604 = vpop.f32.mrb[0].mxu0
    %v605 = vadd.f32 0.0, %v604
    %v606 = vpop.f32.mrb[0].mxu0
    %v607 = vpop.f32.mrb[0].mxu0
    %v608 = vadd.f32 0.0, %v607
    %v609 = vpop.f32.mrb[0].mxu0
    %610 = vdwg.mxu0
    %s611 = sld [smem:[#allocation2 + $0x1]]
    %s612 = sadd.f32 %s611, 1.0
    %v613 = vstv %s612
    %v614 = vmul.f32 %v613, %v490
    %v615 = vmul.f32 %v613, %v491
    %v616 = vmul.f32 %v613, %v492
    %v617 = vmul.f32 %v613, %v493
    %v618 = vmul.f32 %v613, %v494
    %v619 = vmul.f32 %v613, %v495
    %v620 = vmul.f32 %v613, %v496
    %v621 = vmul.f32 %v613, %v497
    %v622 = vmul.f32 %v613, %v498
    %v623 = vmul.f32 %v613, %v499
    %v624 = vmul.f32 %v613, %v500
    %v625 = vmul.f32 %v613, %v501
    %v626 = vmul.f32 %v613, %v502
    %v627 = vmul.f32 %v613, %v503
    %v628 = vmul.f32 %v613, %v504
    %v629 = vmul.f32 %v613, %v505
    %v630 = vadd.f32 %v614, %v549
    %v631 = vadd.f32 %v615, %v552
    %v632 = vadd.f32 %v616, %v557
    %v633 = vadd.f32 %v617, %v560
    %v634 = vadd.f32 %v618, %v565
    %v635 = vadd.f32 %v619, %v568
    %v636 = vadd.f32 %v620, %v573
    %v637 = vadd.f32 %v621, %v576
    %v638 = vadd.f32 %v622, %v581
    %v639 = vadd.f32 %v623, %v584
    %v640 = vadd.f32 %v624, %v589
    %v641 = vadd.f32 %v625, %v592
    %v642 = vadd.f32 %v626, %v597
    %v643 = vadd.f32 %v627, %v600
    %v644 = vadd.f32 %v628, %v605
    %v645 = vadd.f32 %v629, %v608
    %v646 = vpack.c.bf16 %v631, %v630
    %v647 = vpack.c.bf16 %v633, %v632
    %v648 = vpack.c.bf16 %v635, %v634
    %v649 = vpack.c.bf16 %v637, %v636
    %v650 = vpack.c.bf16 %v639, %v638
    %v651 = vpack.c.bf16 %v641, %v640
    %v652 = vpack.c.bf16 %v643, %v642
    %v653 = vpack.c.bf16 %v645, %v644
    %v654 = vld [vmem:[#allocation10] sm:$0xf]
    %v655 = vld [vmem:[#allocation10 + $0x4] sm:$0xf]
    %v656 = vld [vmem:[#allocation10 + $0x8] sm:$0xf]
    %v657 = vld [vmem:[#allocation10 + $0xc] sm:$0xf]
    %v658 = vld [vmem:[#allocation10 + $0x10] sm:$0xf]
    %v659 = vld [vmem:[#allocation10 + $0x14] sm:$0xf]
    %v660 = vld [vmem:[#allocation10 + $0x18] sm:$0xf]
    %v661 = vld [vmem:[#allocation10 + $0x1c] sm:$0xf]
    %v662 = vld [vmem:[#allocation10 + $0x20] sm:$0xf]
    %v663 = vld [vmem:[#allocation10 + $0x24] sm:$0xf]
    %v664 = vld [vmem:[#allocation10 + $0x28] sm:$0xf]
    %v665 = vld [vmem:[#allocation10 + $0x2c] sm:$0xf]
    %v666 = vld [vmem:[#allocation10 + $0x30] sm:$0xf]
    %v667 = vld [vmem:[#allocation10 + $0x34] sm:$0xf]
    %v668 = vld [vmem:[#allocation10 + $0x38] sm:$0xf]
    %v669 = vld [vmem:[#allocation10 + $0x3c] sm:$0xf]
    %v670 = vld [vmem:[%s6] sm:$0x1]
    %v672 = vlaneseq
    %v673 = vshrl.u32 %v672, 7
    %v674 = vsub.s32 0, %v673
    %v675 = vrot.slane %v670, %v674
    %v693 = vunpack.c.l.b16 %v654
    %v694 = vunpack.c.l.b16 %v655
    %v695 = vunpack.c.l.b16 %v656
    %v696 = vunpack.c.l.b16 %v657
    %v697 = vunpack.c.l.b16 %v658
    %v698 = vunpack.c.l.b16 %v659
    %v699 = vunpack.c.l.b16 %v660
    %v700 = vunpack.c.l.b16 %v661
    %v701 = vunpack.c.l.b16 %v662
    %v702 = vunpack.c.l.b16 %v663
    %v703 = vunpack.c.l.b16 %v664
    %v704 = vunpack.c.l.b16 %v665
    %v705 = vunpack.c.l.b16 %v666
    %v706 = vunpack.c.l.b16 %v667
    %v707 = vunpack.c.l.b16 %v668
    %v708 = vunpack.c.l.b16 %v669
    %v709 = vpack.c.b16 %v694, %v693
    %v710 = vpack.c.b16 %v696, %v695
    %v711 = vpack.c.b16 %v698, %v697
    %v712 = vpack.c.b16 %v700, %v699
    %v713 = vpack.c.b16 %v702, %v701
    %v714 = vpack.c.b16 %v704, %v703
    %v715 = vpack.c.b16 %v706, %v705
    %v716 = vpack.c.b16 %v708, %v707
    %725 = vmatprep.subr.bf16.mxu0 0
    %726 = vmatpush1.bf16.msra.mxu0 %v709
    %727 = vmatprep.subr.bf16.mxu0 0
    %728 = vmatpush1.bf16.msra.mxu0 %v710
    %729 = vmatprep.subr.bf16.mxu0 0
    %730 = vmatpush1.bf16.msra.mxu0 %v711
    %731 = vmatprep.subr.bf16.mxu0 0
    %732 = vmatpush1.bf16.msra.mxu0 %v712
    %733 = vmatprep.subr.bf16.mxu0 0
    %734 = vmatpush1.bf16.msra.mxu0 %v713
    %735 = vmatprep.subr.bf16.mxu0 0
    %736 = vmatpush1.bf16.msra.mxu0 %v714
    %737 = vmatprep.subr.bf16.mxu0 0
    %738 = vmatpush1.bf16.msra.mxu0 %v715
    %739 = vmatprep.subr.bf16.mxu0 0
    %740 = vmatpush1.bf16.msra.mxu0 %v716
    %741 = vmatprep.subr.bf16.mxu0 0
    %742 = vmatpush1.bf16.msra.mxu0 0
    %743 = vmatprep.subr.bf16.mxu0 0
    %744 = vmatpush1.bf16.msra.mxu0 0
    %745 = vmatprep.subr.bf16.mxu0 0
    %746 = vmatpush1.bf16.msra.mxu0 0
    %747 = vmatprep.subr.bf16.mxu0 0
    %748 = vmatpush1.bf16.msra.mxu0 0
    %749 = vmatprep.subr.bf16.mxu0 0
    %750 = vmatpush1.bf16.msra.mxu0 0
    %751 = vmatprep.subr.bf16.mxu0 0
    %752 = vmatpush1.bf16.msra.mxu0 0
    %753 = vmatprep.subr.bf16.mxu0 0
    %754 = vmatpush1.bf16.msra.mxu0 0
    %755 = vmatprep.subr.bf16.mxu0 0
    %756 = vmatpush1.bf16.msra.mxu0 0
    %757 = vmatprep.mubr.bf16.mxu0 0
    %758 = vmatmul.mubr.bf16.gmra.mrb[0].mxu0 %v646
    %v759 = vpop.f32.mrb[0].mxu0
    %v760 = vadd.f32 %v675, %v759
    %v761 = vpop.f32.mrb[0].mxu0
    %v762 = vpop.f32.mrb[0].mxu0
    %v763 = vadd.f32 %v675, %v762
    %v764 = vpop.f32.mrb[0].mxu0
    %765 = vmatprep.mubr.bf16.mxu0 0
    %766 = vmatmul.mubr.bf16.gmra.mrb[0].mxu0 %v647
    %v767 = vpop.f32.mrb[0].mxu0
    %v768 = vadd.f32 %v675, %v767
    %v769 = vpop.f32.mrb[0].mxu0
    %v770 = vpop.f32.mrb[0].mxu0
    %v771 = vadd.f32 %v675, %v770
    %v772 = vpop.f32.mrb[0].mxu0
    %773 = vmatprep.mubr.bf16.mxu0 0
    %774 = vmatmul.mubr.bf16.gmra.mrb[0].mxu0 %v648
    %v775 = vpop.f32.mrb[0].mxu0
    %v776 = vadd.f32 %v675, %v775
    %v777 = vpop.f32.mrb[0].mxu0
    %v778 = vpop.f32.mrb[0].mxu0
    %v779 = vadd.f32 %v675, %v778
    %v780 = vpop.f32.mrb[0].mxu0
    %781 = vmatprep.mubr.bf16.mxu0 0
    %782 = vmatmul.mubr.bf16.gmra.mrb[0].mxu0 %v649
    %v783 = vpop.f32.mrb[0].mxu0
    %v784 = vadd.f32 %v675, %v783
    %v785 = vpop.f32.mrb[0].mxu0
    %v786 = vpop.f32.mrb[0].mxu0
    %v787 = vadd.f32 %v675, %v786
    %v788 = vpop.f32.mrb[0].mxu0
    %789 = vmatprep.mubr.bf16.mxu0 0
    %790 = vmatmul.mubr.bf16.gmra.mrb[0].mxu0 %v650
    %v791 = vpop.f32.mrb[0].mxu0
    %v792 = vadd.f32 %v675, %v791
    %v793 = vpop.f32.mrb[0].mxu0
    %v794 = vpop.f32.mrb[0].mxu0
    %v795 = vadd.f32 %v675, %v794
    %v796 = vpop.f32.mrb[0].mxu0
    %797 = vmatprep.mubr.bf16.mxu0 0
    %798 = vmatmul.mubr.bf16.gmra.mrb[0].mxu0 %v651
    %v799 = vpop.f32.mrb[0].mxu0
    %v800 = vadd.f32 %v675, %v799
    %v801 = vpop.f32.mrb[0].mxu0
    %v802 = vpop.f32.mrb[0].mxu0
    %v803 = vadd.f32 %v675, %v802
    %v804 = vpop.f32.mrb[0].mxu0
    %805 = vmatprep.mubr.bf16.mxu0 0
    %806 = vmatmul.mubr.bf16.gmra.mrb[0].mxu0 %v652
    %v807 = vpop.f32.mrb[0].mxu0
    %v808 = vadd.f32 %v675, %v807
    %v809 = vpop.f32.mrb[0].mxu0
    %v810 = vpop.f32.mrb[0].mxu0
    %v811 = vadd.f32 %v675, %v810
    %v812 = vpop.f32.mrb[0].mxu0
    %813 = vmatprep.mubr.bf16.mxu0 0
    %814 = vmatmul.mubr.bf16.gmra.mrb[0].mxu0 %v653
    %v815 = vpop.f32.mrb[0].mxu0
    %v816 = vadd.f32 %v675, %v815
    %v817 = vpop.f32.mrb[0].mxu0
    %v818 = vpop.f32.mrb[0].mxu0
    %v819 = vadd.f32 %v675, %v818
    %v820 = vpop.f32.mrb[0].mxu0
    %821 = vdwg.mxu0
    %v822 = vmax.f32 %v760, 0.0
    %v823 = vmax.f32 %v763, 0.0
    %v824 = vmax.f32 %v768, 0.0
    %v825 = vmax.f32 %v771, 0.0
    %v826 = vmax.f32 %v776, 0.0
    %v827 = vmax.f32 %v779, 0.0
    %v828 = vmax.f32 %v784, 0.0
    %v829 = vmax.f32 %v787, 0.0
    %v830 = vmax.f32 %v792, 0.0
    %v831 = vmax.f32 %v795, 0.0
    %v832 = vmax.f32 %v800, 0.0
    %v833 = vmax.f32 %v803, 0.0
    %v834 = vmax.f32 %v808, 0.0
    %v835 = vmax.f32 %v811, 0.0
    %v836 = vmax.f32 %v816, 0.0
    %v837 = vmax.f32 %v819, 0.0
    %838 = vst [vmem:[#allocation12] sm:$0xff] %v822
    %839 = vst [vmem:[#allocation12 + $0x8] sm:$0xff] %v823
    %840 = vst [vmem:[#allocation12 + $0x10] sm:$0xff] %v824
    %841 = vst [vmem:[#allocation12 + $0x18] sm:$0xff] %v825
    %842 = vst [vmem:[#allocation12 + $0x20] sm:$0xff] %v826
    %843 = vst [vmem:[#allocation12 + $0x28] sm:$0xff] %v827
    %844 = vst [vmem:[#allocation12 + $0x30] sm:$0xff] %v828
    %845 = vst [vmem:[#allocation12 + $0x38] sm:$0xff] %v829
    %846 = vst [vmem:[#allocation12 + $0x40] sm:$0xff] %v830
    %847 = vst [vmem:[#allocation12 + $0x48] sm:$0xff] %v831
    %848 = vst [vmem:[#allocation12 + $0x50] sm:$0xff] %v832
    %849 = vst [vmem:[#allocation12 + $0x58] sm:$0xff] %v833
    %850 = vst [vmem:[#allocation12 + $0x60] sm:$0xff] %v834
    %851 = vst [vmem:[#allocation12 + $0x68] sm:$0xff] %v835
    %852 = vst [vmem:[#allocation12 + $0x70] sm:$0xff] %v836
    %853 = vst [vmem:[#allocation12 + $0x78] sm:$0xff] %v837
    // Predicated region
    $region50: #{tpu_custom_call.1} parent=1 // pred_check
      _
    $region51: #{tpu_custom_call.1} parent=1 // pred_check_branch
      %855 = sbr.rel (0) target = $region53
    $region52: #{tpu_custom_call.1} parent=1 // pred_region
      %s857 = ssub.s32 2048, 2048
      %858 = vsyncadd [#allocation4], %s857
      %s859 = sshll.u32 [#allocation12], 4
      %s860 = int_to_ptr.vmem [resolvable:$true] %s859
      %865 = dma.vmem_to_hbm [thread:$0]  %s860, 2048, %s7, [#allocation4], 128, 128, 8
    $region53: #{tpu_custom_call.1} parent=1 // pred_fallthru
      _
    // Predicated region
    $region54: #{tpu_custom_call.1} parent=1 // pred_check
      _
    $region55: #{tpu_custom_call.1} parent=1 // pred_check_branch
      %867 = sbr.rel (0) target = $region57
    $region56: #{tpu_custom_call.1} parent=1 // pred_region
      %868 = dma.done [#allocation4], 2048
    $region57: #{tpu_custom_call.1} parent=1 // pred_fallthru
      _
    %869 = vsyncpa [#allocation3], 1
    %870 = vsyncpa [#allocation8], 1
    %871 = vsyncpa [#allocation11], 1
    %872 = vsyncpa [#allocation4], 1
    %873 = vsyncpa [#allocation5], 1

</llo_original>
